<compile_context>
chip_gen: v6e
topology: v6e:2x2x1
jax: 0.10.0
libtpu: 0.0.40
codegen_flags: <defaults>
</compile_context>

<pallas_src>
import functools

import jax
import jax.numpy as jnp
import numpy as np
from jax.experimental import pallas as pl
from jax.experimental.pallas import tpu as pltpu


def _deconv_kernel(x_ref, m_ref, b_ref, o_ref, *, apply_relu):
    """One row-tile grid step.

    x_ref: (row_tile, K3)   row tile of the shifted/flattened input
    m_ref: (K3, P*NL)       phase-fused banded weight matrix (resident)
    b_ref: (1, P*NL)        f32 bias row (resident)
    o_ref: (row_tile, P*NL) lane-dense output tile
    """
    acc = jnp.dot(x_ref[...], m_ref[...], preferred_element_type=jnp.float32)
    acc = acc + b_ref[...]          # VPU epilogue — free under the MXU matmul
    if apply_relu:
        acc = jnp.maximum(acc, 0.0)
    o_ref[...] = acc.astype(o_ref.dtype)


def _tap_geometry(K, s, pad_lo):
    """Phase/tap geometry (identical for both spatial dims; square kernel)."""
    offs = [(r + k - pad_lo) // s
            for r in range(s) for k in range(K)
            if (r + k - pad_lo) % s == 0]
    off_min, off_max = min(offs), max(offs)
    T = off_max - off_min + 1        # taps per phase, padded to a uniform count
    pad_before = max(0, -off_min)    # zero pad of the UNDILATED input
    base = max(off_min, 0)           # first padded row/col read per tile row
    return off_min, T, pad_before, base


def _choose_row_tiling(R):
    """(R_pad, row_tile): row_tile divides R_pad, sublane-aligned, <= 256 rows,
    and >= 2 grid steps whenever there is enough work (keeps both v7x TCs fed)."""
    if R <= 16:
        r_pad = max(8, -(-R // 8) * 8)
        return r_pad, r_pad
    r_pad = -(-R // 16) * 16
    best, t = 16, 16
    while t <= min(256, r_pad // 2):
        if r_pad % t == 0:
            best = t
        t += 16
    return r_pad, best


def make_deconv(weight_t, bias_v, *, stride, padding, output_padding,
                act=False, compute_dtype=jnp.float32):
    """Factory for ConvTranspose2d(+ReLU) forward matching PyTorch semantics.

    weight_t: (Cin, Cout, K, K)  PyTorch ConvTranspose2d weight layout
    bias_v:   (Cout,)
    Returns fn(x_nchw: (N,Cin,H,W)) -> (N,Cout,Ho,Wo).  The phase-fused banded
    weight matrix is built ONCE per input shape on host (numpy) and cached.
    """
    w_np = np.asarray(weight_t, dtype=np.float32)
    b_np = np.asarray(bias_v, dtype=np.float32)
    Cin, Cout, K, _ = w_np.shape
    s = int(stride)
    pad_lo = K - 1 - padding
    assert pad_lo >= 0, "requires padding <= kernel_size - 1"
    off_min, T, pad_before, base = _tap_geometry(K, s, pad_lo)
    P = s * s
    # conv-form weight: w_conv[kh, kw, ci, co] = w[ci, co, K-1-kh, K-1-kw]
    w_conv = np.transpose(w_np[:, :, ::-1, ::-1], (2, 3, 0, 1)).copy()

    cache = {}

    def _build(N, H, W):
        Ho = (H - 1) * s - 2 * padding + K + output_padding
        Wo = (W - 1) * s - 2 * padding + K + output_padding
        Hq = -(-Ho // s)                 # rows per output phase (ceil)
        Wq = -(-Wo // s)                 # cols per output phase
        Hpad = Hq + T - 1 + base
        Wpad = Wq + T - 1 + base
        pad_after_h = Hpad - pad_before - H
        pad_after_w = Wpad - pad_before - W
        assert pad_after_h >= 0 and pad_after_w >= 0

        NL = Wq * Cout                   # per-phase lane width
        PNL = P * NL                     # phase-fused lane width (demo: 512)
        K3c0 = T * Wpad * Cin            # raw contraction length
        align = 16                       # bf16 sublane packing (fine for f32 too)
        K3c = -(-K3c0 // align) * align  # aligned contraction length

        # ---- host-side banded, phase-fused weight matrix (built once, cached) ----
        M = np.zeros((P, T, Wpad, Cin, Wq, Cout), np.float32)
        qw = np.arange(Wq)
        for rh in range(s):
            for kh in range(K):
                if (rh + kh - pad_lo) % s:
                    continue
                th = (rh + kh - pad_lo) // s - off_min
                for rw in range(s):
                    for kw in range(K):
                        if (rw + kw - pad_lo) % s:
                            continue
                        cw = (rw + kw - pad_lo) // s + pad_before
                        p = rh * s + rw
                        M[p, th, qw + cw, :, qw, :] += w_conv[kh, kw]
        M = M.reshape(P, K3c0, NL).transpose(1, 0, 2).reshape(K3c0, PNL)
        if K3c != K3c0:
            M = np.pad(M, ((0, K3c - K3c0), (0, 0)))
        M_dev = jnp.asarray(M, dtype=compute_dtype)                    # (K3c, PNL)
        bias_dev = jnp.asarray(np.tile(b_np, P * Wq).reshape(1, PNL))  # f32 row

        R = N * Hq                       # flattened (batch, phase-row) rows
        R_pad, row_tile = _choose_row_tiling(R)
        n_tiles = R_pad // row_tile

        kernel = functools.partial(_deconv_kernel, apply_relu=act)

        @jax.jit
        def apply(x_nchw):
            # --- layout plumbing only (no FLOPs) ---
            xn = jnp.transpose(x_nchw, (0, 2, 3, 1))                   # NHWC
            xp = jnp.pad(xn, ((0, 0), (pad_before, pad_after_h),
                              (pad_before, pad_after_w), (0, 0)))
            x2 = xp.reshape(N, Hpad, Wpad * Cin)                       # W,Cin merged
            # TODO(synk): at large H*W, replace the T-slab concat with T
            #             accumulating matmuls against x2 inside the kernel to
            #             avoid writing the padded input T extra times to HBM.
            slabs = [x2[:, base + t: base + t + Hq, :] for t in range(T)]
            x3 = jnp.concatenate(slabs, axis=-1) if T > 1 else slabs[0]
            x3 = x3.reshape(R, K3c0)
            x3 = jnp.pad(x3, ((0, R_pad - R), (0, K3c - K3c0)))
            x3 = x3.astype(compute_dtype)

            out = pl.pallas_call(
                kernel,
                out_shape=jax.ShapeDtypeStruct((R_pad, PNL), jnp.float32),
                grid_spec=pltpu.PrefetchScalarGridSpec(
                    num_scalar_prefetch=0,
                    grid=(n_tiles,),
                    in_specs=[
                        pl.BlockSpec((row_tile, K3c), lambda t: (t, 0)),
                        pl.BlockSpec((K3c, PNL), lambda t: (0, 0)),    # resident
                        pl.BlockSpec((1, PNL), lambda t: (0, 0)),      # resident
                    ],
                    out_specs=pl.BlockSpec((row_tile, PNL), lambda t: (t, 0)),
                ),
                # TODO(synk): when scaling W, width-tile M (the banded block is
                #             shift-invariant so one width-tile matrix is reused)
                #             and set vmem_limit_bytes so the resident M block
                #             fits v7x's 64 MiB VMEM.
                compiler_params=pltpu.CompilerParams(
                    dimension_semantics=("parallel",)),
            )(x3, M_dev, bias_dev)

            # --- un-interleave the s*s phases back to (N, Cout, Ho, Wo) ---
            y = out[:R].reshape(N, Hq, s, s, Wq, Cout)   # [n, qh, rh, rw, qw, c]
            y = jnp.transpose(y, (0, 1, 2, 4, 3, 5))     # [n, qh, rh, qw, rw, c]
            y = y.reshape(N, Hq * s, Wq * s, Cout)[:, :Ho, :Wo, :]
            return jnp.transpose(y, (0, 3, 1, 2))        # NCHW

        return apply

    def deconv(x_nchw):
        N, _, H, W = x_nchw.shape
        key = (int(N), int(H), int(W))
        if key not in cache:
            cache[key] = _build(*key)
        return cache[key](x_nchw)

    return deconv


def _reference(x_nchw, weight_t, bias, *, stride, padding, output_padding, act):
    """Pure-JAX reference via lax.conv_general_dilated (lhs_dilation = transposed conv)."""
    Cin, Cout, K, _ = weight_t.shape
    x = jnp.transpose(x_nchw, (0, 2, 3, 1))
    w_conv = jnp.transpose(weight_t[:, :, ::-1, ::-1], (2, 3, 0, 1))  # HWIO
    pad_lo = K - 1 - padding
    pad_hi = K - 1 - padding + output_padding
    y = jax.lax.conv_general_dilated(
        x, w_conv,
        window_strides=(1, 1),
        padding=((pad_lo, pad_hi), (pad_lo, pad_hi)),
        lhs_dilation=(stride, stride),
        dimension_numbers=("NHWC", "HWIO", "NHWC"),
    )
    y = y + bias.reshape(1, 1, 1, Cout)
    if act:
        y = jnp.maximum(y, 0.0)
    return jnp.transpose(y, (0, 3, 1, 2))


if __name__ == "__main__":
    # Module config: Deconv(input_channels=4, n_feats=8, kernel_size=3,
    #                       stride=2, padding=1, output_padding=1, bias=True, act=True)
    Cin, Cout, K = 4, 8, 3
    stride, padding, output_padding, act = 2, 1, 1, True
    N, H, W = 2, 16, 16

    key = jax.random.PRNGKey(0)
    kx, kw, kb = jax.random.split(key, 3)

    x = jax.random.normal(kx, (N, Cin, H, W), dtype=jnp.float32)
    # Deterministic param init (PyTorch-style uniform bound), not a checkpoint load.
    fan_in = Cin * K * K
    bound = 1.0 / np.sqrt(fan_in)
    weight_t = jax.random.uniform(kw, (Cin, Cout, K, K), jnp.float32, -bound, bound)
    bias = jax.random.uniform(kb, (Cout,), jnp.float32, -bound, bound)

    ref = _reference(x, weight_t, bias, stride=stride, padding=padding,
                     output_padding=output_padding, act=act)
    expected_hw = (H - 1) * stride - 2 * padding + K + output_padding

    # f32 compute path: tight-tolerance correctness check.
    deconv_f32 = make_deconv(weight_t, bias, stride=stride, padding=padding,
                             output_padding=output_padding, act=act,
                             compute_dtype=jnp.float32)
    out = jax.block_until_ready(deconv_f32(x))
    assert out.shape == (N, Cout, expected_hw, expected_hw), out.shape
    np.testing.assert_allclose(np.asarray(out), np.asarray(ref), rtol=1e-4, atol=1e-4)

    # bf16 compute path (MXU-native on v5e/v6e/v7x, f32 accumulation): looser tolerance.
    deconv_bf16 = make_deconv(weight_t, bias, stride=stride, padding=padding,
                              output_padding=output_padding, act=act,
                              compute_dtype=jnp.bfloat16)
    out_bf = jax.block_until_ready(deconv_bf16(x))
    np.testing.assert_allclose(np.asarray(out_bf), np.asarray(ref), rtol=2e-2, atol=2e-2)

    print("KERNEL_OK")
</pallas_src>

<mosaic_0001>
module attributes {stable_mosaic.version = 11 : i64} {
  func.func @_deconv_kernel(%arg0: i32, %arg1: memref<16x144xf32, #tpu.memory_space<vmem>>, %arg2: memref<144x512xf32, #tpu.memory_space<vmem>>, %arg3: memref<1x512xf32, #tpu.memory_space<vmem>>, %arg4: memref<16x512xf32, #tpu.memory_space<vmem>>) attributes {dimension_semantics = [#tpu.dimension_semantics<parallel>], iteration_bounds = array<i64: 2>, scalar_prefetch = 0 : i64, scratch_operands = 0 : i64, tpu.core_type = #tpu.core_type<tc>, window_params = [{transform_indices = @transform_0, window_bounds = array<i64: 16, 144>}, {pipeline_mode = #tpu.pipeline_mode<synchronous>, transform_indices = @transform_1, window_bounds = array<i64: 144, 512>}, {pipeline_mode = #tpu.pipeline_mode<synchronous>, transform_indices = @transform_2, window_bounds = array<i64: 1, 512>}, {transform_indices = @transform_3, window_bounds = array<i64: 16, 512>}]} {
    %c0 = arith.constant 0 : index
    %c0_0 = arith.constant 0 : index
    %0 = vector.load %arg1[%c0, %c0_0] : memref<16x144xf32, #tpu.memory_space<vmem>>, vector<16x144xf32>
    %c0_1 = arith.constant 0 : index
    %c0_2 = arith.constant 0 : index
    %1 = vector.load %arg2[%c0_1, %c0_2] : memref<144x512xf32, #tpu.memory_space<vmem>>, vector<144x512xf32>
    %cst = arith.constant dense<0.000000e+00> : vector<16x512xf32>
    %2 = tpu.matmul %0, %1, %cst {dimension_numbers = #tpu.dot_dimension_numbers<[1], [0], [0], [1], [0, 0, 1, 1], [], []>} : vector<16x144xf32>, vector<144x512xf32>, vector<16x512xf32> -> vector<16x512xf32>
    %c0_3 = arith.constant 0 : index
    %c0_4 = arith.constant 0 : index
    %3 = vector.load %arg3[%c0_3, %c0_4] : memref<1x512xf32, #tpu.memory_space<vmem>>, vector<1x512xf32>
    %4 = vector.broadcast %3 : vector<1x512xf32> to vector<16x512xf32>
    %5 = arith.addf %2, %4 : vector<16x512xf32>
    %cst_5 = arith.constant 0.000000e+00 : f32
    %6 = vector.broadcast %cst_5 : f32 to vector<16x512xf32>
    %7 = arith.maximumf %5, %6 : vector<16x512xf32>
    %c0_6 = arith.constant 0 : index
    %c0_7 = arith.constant 0 : index
    %8 = vector.load %arg4[%c0_6, %c0_7] : memref<16x512xf32, #tpu.memory_space<vmem>>, vector<16x512xf32>
    tpu.vector_store %arg4[%c0_6, %c0_7], %7 {strides = array<i32>} : memref<16x512xf32, #tpu.memory_space<vmem>>, vector<16x512xf32>,
    return
  }
  func.func @transform_0(%arg0: i32) -> (i32, i32) {
    %c0_i32 = arith.constant 0 : i32
    %c0_i32_0 = arith.constant 0 : i32
    return %arg0, %c0_i32 : i32, i32
  }
  func.func @transform_1(%arg0: i32) -> (i32, i32) {
    %c0_i32 = arith.constant 0 : i32
    %c0_i32_0 = arith.constant 0 : i32
    %c0_i32_1 = arith.constant 0 : i32
    return %c0_i32, %c0_i32_0 : i32, i32
  }
  func.func @transform_2(%arg0: i32) -> (i32, i32) {
    %c0_i32 = arith.constant 0 : i32
    %c0_i32_0 = arith.constant 0 : i32
    %c0_i32_1 = arith.constant 0 : i32
    return %c0_i32, %c0_i32_0 : i32, i32
  }
  func.func @transform_3(%arg0: i32) -> (i32, i32) {
    %c0_i32 = arith.constant 0 : i32
    %c0_i32_0 = arith.constant 0 : i32
    return %arg0, %c0_i32 : i32, i32
  }
}

</mosaic_0001>

<llo_original>
// kernel: apply.1
$region0: #{apply.1}
  #allocation0 [shape = 'u32[]', space=smem, size = 0x4, offset = 0x4, fixed_abs, tag = 'smem constant byte address 0x4 - core index']
  #allocation1 [shape = 'u32[144,128]{1,0:T(1,128)}', space=vmem, size = 0x12000, scoped, tag = 'internal scratch']
  %s0 = inlined_call_operand.vmem [shape: f32[32,144], index: 0, kind: input, shape index: {}]
  %s1 = inlined_call_operand.vmem [shape: f32[144,512], index: 1, kind: input, shape index: {}]
  %s2 = inlined_call_operand.vmem [shape: f32[1,512], index: 2, kind: input, shape index: {}]
  %s3 = inlined_call_operand.vmem [shape: f32[32,512], index: 3, kind: output, shape index: {}]
  %s4 = sld [smem:[#allocation0]]
  $region45: #{apply.1} parent=0
    _
  %s6 = ssub.s32 1, %s4
  %s7 = scalar_select 0, %s6, %s4
  loop: start=0, step=1, limit=4
  $region2: #{apply.1} parent=0 // loop_pre_header
    _
  $region3: #{apply.1} parent=0 // loop_header
    %s9 = sphi 0, %s13
    %p10 = scmp.ge.s32.totalorder %s9, 4
    %s19 = sphi 0, %s21
    %s22 = sphi 0, %s19
    %s23 = sphi 0, %s22
    %s39 = sphi 0, %s23
    %s43 = sphi 0, %s43
    %s45 = sphi 0, %s43
    %s46 = sphi 0, %s45
    %s60 = sphi 0, %s46
    %s64 = sphi 0, %s64
    %s66 = sphi 0, %s64
    %s67 = sphi 0, %s66
    %s81 = sphi 0, %s67
    %s87 = sphi 0, %s89
    %s90 = sphi 0, %s87
    %s91 = sphi 0, %s90
    %s107 = sphi 0, %s91
  $region4: #{apply.1} parent=0 // loop_header_branch
    %12 = sbr.rel (%p10) target = $region8
  $region5: #{apply.1} parent=0 // loop_body
    %s14 = ssub.s32 %s9, 1
    %s15 = ssub.s32 %s9, 2
    %s16 = sadd.s32 %s9, 1
    %s17 = ssub.s32 %s9, %s16
    %p18 = scmp.eq.s32.totalorder %s17, 0
    %s20 = sadd.s32 %s19, 1
    %s21 = scalar_select %p18, %s19, %s20
    %p24 = pneg %p18
    %p25 = scmp.eq.s32.totalorder %s9, 1
    %p26 = por %p24, %p25
    %p27 = scmp.ne.s32.totalorder %s19, %s22
    %p28 = scmp.eq.s32.totalorder %s9, 0
    %p29 = por %p27, %p28
    %p30 = scmp.ne.s32.totalorder %s19, %s22
    %p31 = scmp.eq.s32.totalorder %s14, 1
    %p32 = por %p30, %p31
    %p33 = scmp.ne.s32.totalorder %s22, %s23
    %p34 = scmp.eq.s32.totalorder %s14, 0
    %p35 = por %p33, %p34
    %p36 = scmp.ne.s32.totalorder %s22, %s23
    %p37 = scmp.eq.s32.totalorder %s15, 1
    %p38 = por %p36, %p37
    %p40 = scmp.ne.s32.totalorder %s23, %s39
    %p41 = scmp.eq.s32.totalorder %s15, 0
    %p42 = por %p40, %p41
    %s44 = sadd.s32 %s43, 1
    %p47 = scmp.eq.s32.totalorder %s9, 1
    %p48 = scmp.ne.s32.totalorder %s43, %s45
    %p49 = scmp.eq.s32.totalorder %s9, 0
    %p50 = por %p48, %p49
    %p51 = scmp.ne.s32.totalorder %s43, %s45
    %p52 = scmp.eq.s32.totalorder %s14, 1
    %p53 = por %p51, %p52
    %p54 = scmp.ne.s32.totalorder %s45, %s46
    %p55 = scmp.eq.s32.totalorder %s14, 0
    %p56 = por %p54, %p55
    %p57 = scmp.ne.s32.totalorder %s45, %s46
    %p58 = scmp.eq.s32.totalorder %s15, 1
    %p59 = por %p57, %p58
    %p61 = scmp.ne.s32.totalorder %s46, %s60
    %p62 = scmp.eq.s32.totalorder %s15, 0
    %p63 = por %p61, %p62
    %s65 = sadd.s32 %s64, 1
    %p68 = scmp.eq.s32.totalorder %s9, 1
    %p69 = scmp.ne.s32.totalorder %s64, %s66
    %p70 = scmp.eq.s32.totalorder %s9, 0
    %p71 = por %p69, %p70
    %p72 = scmp.ne.s32.totalorder %s64, %s66
    %p73 = scmp.eq.s32.totalorder %s14, 1
    %p74 = por %p72, %p73
    %p75 = scmp.ne.s32.totalorder %s66, %s67
    %p76 = scmp.eq.s32.totalorder %s14, 0
    %p77 = por %p75, %p76
    %p78 = scmp.ne.s32.totalorder %s66, %s67
    %p79 = scmp.eq.s32.totalorder %s15, 1
    %p80 = por %p78, %p79
    %p82 = scmp.ne.s32.totalorder %s67, %s81
    %p83 = scmp.eq.s32.totalorder %s15, 0
    %p84 = por %p82, %p83
    %s85 = ssub.s32 %s9, %s16
    %p86 = scmp.eq.s32.totalorder %s85, 0
    %s88 = sadd.s32 %s87, 1
    %s89 = scalar_select %p86, %s87, %s88
    %p92 = pneg %p86
    %p93 = scmp.eq.s32.totalorder %s9, 1
    %p94 = por %p92, %p93
    %p95 = scmp.ne.s32.totalorder %s87, %s90
    %p96 = scmp.eq.s32.totalorder %s9, 0
    %p97 = por %p95, %p96
    %p98 = scmp.ne.s32.totalorder %s87, %s90
    %p99 = scmp.eq.s32.totalorder %s14, 1
    %p100 = por %p98, %p99
    %p101 = scmp.ne.s32.totalorder %s90, %s91
    %p102 = scmp.eq.s32.totalorder %s14, 0
    %p103 = por %p101, %p102
    %p104 = scmp.ne.s32.totalorder %s90, %s91
    %p105 = scmp.eq.s32.totalorder %s15, 1
    %p106 = por %p104, %p105
    %p108 = scmp.ne.s32.totalorder %s91, %s107
    %p109 = scmp.eq.s32.totalorder %s15, 0
    %p110 = por %p108, %p109
    %p111 = scmp.le.s32.totalorder 1, %s9
    %p112 = scmp.lt.s32.totalorder %s9, 3
    %p113 = pnand %p111, %p112
    %p114 = pneg %p113
    // Predicated region
    $region9: #{apply.1} parent=5 // pred_check
      _
    $region10: #{apply.1} parent=5 // pred_check_branch
      %116 = sbr.rel (%p113) target = $region12
    $region11: #{apply.1} parent=5 // pred_region
      %s117 = ssub.s32 %s9, 1
      // Predicated region
      $region13: #{apply.1} parent=11 // pred_check
        %p118 = pneg %p56
      $region14: #{apply.1} parent=11 // pred_check_branch
        %120 = sbr.rel (%p118) target = $region16
      $region15: #{apply.1} parent=11 // pred_region
        _
      $region16: #{apply.1} parent=11 // pred_fallthru
        _
      // Predicated region
      $region17: #{apply.1} parent=11 // pred_check
        %p121 = pneg %p77
      $region18: #{apply.1} parent=11 // pred_check_branch
        %123 = sbr.rel (%p121) target = $region20
      $region19: #{apply.1} parent=11 // pred_region
        _
      $region20: #{apply.1} parent=11 // pred_fallthru
        _
    $region12: #{apply.1} parent=5 // pred_fallthru
      _
    %p124 = scmp.lt.s32.totalorder %s9, 2
    // Predicated region
    $region21: #{apply.1} parent=5 // pred_check
      %p125 = pneg %p124
    $region22: #{apply.1} parent=5 // pred_check_branch
      %127 = sbr.rel (%p125) target = $region24
    $region23: #{apply.1} parent=5 // pred_region
      // Predicated region
      $region25: #{apply.1} parent=23 // pred_check
        %p128 = pneg %p29
      $region26: #{apply.1} parent=23 // pred_check_branch
        %130 = sbr.rel (%p128) target = $region28
      $region27: #{apply.1} parent=23 // pred_region
        %s131 = smul.u32 2, %s9
        %p132 = scmp.lt.s32.totalorder %s131, 3
        %s133 = scalar_select %p132, %s131, 3
        %s134 = smul.addr %s133, 2
        %s135 = smul.addr %s134, 8
        %s136 = scalar_lea.vmem %s0, %s135
        %s137 = smul.u32 2, %s9
      $region28: #{apply.1} parent=23 // pred_fallthru
        _
    $region24: #{apply.1} parent=5 // pred_fallthru
      _
    %p138 = scmp.le.s32.totalorder 1, %s9
    %p139 = scmp.lt.s32.totalorder %s9, 3
    %p140 = pnand %p138, %p139
    %p141 = pneg %p140
    // Predicated region
    $region29: #{apply.1} parent=5 // pred_check
      _
    $region30: #{apply.1} parent=5 // pred_check_branch
      %143 = sbr.rel (%p140) target = $region32
    $region31: #{apply.1} parent=5 // pred_region
      %s144 = ssub.s32 %s9, 1
      %s145 = smul.u32 2, %s14
      %p146 = scmp.lt.s32.totalorder %s145, 3
      %s147 = scalar_select %p146, %s145, 3
      %s148 = smul.addr %s147, 2
      %s149 = smul.addr %s148, 8
      %s150 = scalar_lea.vmem %s0, %s149
      %p151 = pneg %p35
      %p152 = pneg %p32
      %p153 = pneg %p56
      %p154 = pneg %p53
      %p155 = pneg %p77
      %p156 = pneg %p74
      %p157 = pneg %p103
      %p158 = pneg %p100
      %s159 = smul.u32 2, %s14
      %p160 = scmp.lt.s32.totalorder %s159, 3
      %s161 = scalar_select %p160, %s159, 3
      %s162 = smul.addr %s161, 4
      %s163 = smul.addr %s162, 8
      %s164 = scalar_lea.vmem %s3, %s163
      %s165 = smul.u32 2, %s14
      %p166 = scmp.lt.s32.totalorder %s165, 3
      %s167 = scalar_select %p166, %s165, 3
      %s168 = smul.addr %s167, 2
      %s169 = smul.addr %s168, 8
      %s170 = scalar_lea.vmem %s0, %s169
      %s171 = smul.u32 2, %s14
      %s172 = smul.u32 2, %s14
      %p173 = scmp.lt.s32.totalorder %s172, 3
      %s174 = scalar_select %p173, %s172, 3
      %s175 = smul.addr %s174, 4
      %s176 = smul.addr %s175, 8
      %s177 = scalar_lea.vmem %s3, %s176
      %s178 = smul.u32 2, %s14
      %v179 = vld [vmem:[%s170] sm:$0xff]
      %v180 = vld [vmem:[%s170 + $0x8] sm:$0xff]
      %v181 = vld [vmem:[%s170 + $0x10] sm:$0xff]
      %v182 = vld [vmem:[%s170 + $0x18] sm:$0xff]
      %v183 = vld [vmem:[%s1] sm:$0xff]
      %v184 = vld [vmem:[%s1 + $0x8] sm:$0xff]
      %v185 = vld [vmem:[%s1 + $0x10] sm:$0xff]
      %v186 = vld [vmem:[%s1 + $0x18] sm:$0xff]
      %v187 = vld [vmem:[%s1 + $0x20] sm:$0xff]
      %v188 = vld [vmem:[%s1 + $0x28] sm:$0xff]
      %v189 = vld [vmem:[%s1 + $0x30] sm:$0xff]
      %v190 = vld [vmem:[%s1 + $0x38] sm:$0xff]
      %v191 = vld [vmem:[%s1 + $0x40] sm:$0xff]
      %v192 = vld [vmem:[%s1 + $0x48] sm:$0xff]
      %v193 = vld [vmem:[%s1 + $0x50] sm:$0xff]
      %v194 = vld [vmem:[%s1 + $0x58] sm:$0xff]
      %v195 = vld [vmem:[%s1 + $0x60] sm:$0xff]
      %v196 = vld [vmem:[%s1 + $0x68] sm:$0xff]
      %v197 = vld [vmem:[%s1 + $0x70] sm:$0xff]
      %v198 = vld [vmem:[%s1 + $0x78] sm:$0xff]
      %v199 = vld [vmem:[%s1 + $0x80] sm:$0xff]
      %v200 = vld [vmem:[%s1 + $0x88] sm:$0xff]
      %v201 = vld [vmem:[%s1 + $0x90] sm:$0xff]
      %v202 = vld [vmem:[%s1 + $0x98] sm:$0xff]
      %v203 = vld [vmem:[%s1 + $0xa0] sm:$0xff]
      %v204 = vld [vmem:[%s1 + $0xa8] sm:$0xff]
      %v205 = vld [vmem:[%s1 + $0xb0] sm:$0xff]
      %v206 = vld [vmem:[%s1 + $0xb8] sm:$0xff]
      %v207 = vld [vmem:[%s1 + $0xc0] sm:$0xff]
      %v208 = vld [vmem:[%s1 + $0xc8] sm:$0xff]
      %v209 = vld [vmem:[%s1 + $0xd0] sm:$0xff]
      %v210 = vld [vmem:[%s1 + $0xd8] sm:$0xff]
      %v211 = vld [vmem:[%s1 + $0xe0] sm:$0xff]
      %v212 = vld [vmem:[%s1 + $0xe8] sm:$0xff]
      %v213 = vld [vmem:[%s1 + $0xf0] sm:$0xff]
      %v214 = vld [vmem:[%s1 + $0xf8] sm:$0xff]
      %v215 = vld [vmem:[%s1 + $0x100] sm:$0xff]
      %v216 = vld [vmem:[%s1 + $0x108] sm:$0xff]
      %v217 = vld [vmem:[%s1 + $0x110] sm:$0xff]
      %v218 = vld [vmem:[%s1 + $0x118] sm:$0xff]
      %v219 = vld [vmem:[%s1 + $0x120] sm:$0xff]
      %v220 = vld [vmem:[%s1 + $0x128] sm:$0xff]
      %v221 = vld [vmem:[%s1 + $0x130] sm:$0xff]
      %v222 = vld [vmem:[%s1 + $0x138] sm:$0xff]
      %v223 = vld [vmem:[%s1 + $0x140] sm:$0xff]
      %v224 = vld [vmem:[%s1 + $0x148] sm:$0xff]
      %v225 = vld [vmem:[%s1 + $0x150] sm:$0xff]
      %v226 = vld [vmem:[%s1 + $0x158] sm:$0xff]
      %v227 = vld [vmem:[%s1 + $0x160] sm:$0xff]
      %v228 = vld [vmem:[%s1 + $0x168] sm:$0xff]
      %v229 = vld [vmem:[%s1 + $0x170] sm:$0xff]
      %v230 = vld [vmem:[%s1 + $0x178] sm:$0xff]
      %v231 = vld [vmem:[%s1 + $0x180] sm:$0xff]
      %v232 = vld [vmem:[%s1 + $0x188] sm:$0xff]
      %v233 = vld [vmem:[%s1 + $0x190] sm:$0xff]
      %v234 = vld [vmem:[%s1 + $0x198] sm:$0xff]
      %v235 = vld [vmem:[%s1 + $0x1a0] sm:$0xff]
      %v236 = vld [vmem:[%s1 + $0x1a8] sm:$0xff]
      %v237 = vld [vmem:[%s1 + $0x1b0] sm:$0xff]
      %v238 = vld [vmem:[%s1 + $0x1b8] sm:$0xff]
      %v239 = vld [vmem:[%s1 + $0x1c0] sm:$0xff]
      %v240 = vld [vmem:[%s1 + $0x1c8] sm:$0xff]
      %v241 = vld [vmem:[%s1 + $0x1d0] sm:$0xff]
      %v242 = vld [vmem:[%s1 + $0x1d8] sm:$0xff]
      %v243 = vld [vmem:[%s1 + $0x1e0] sm:$0xff]
      %v244 = vld [vmem:[%s1 + $0x1e8] sm:$0xff]
      %v245 = vld [vmem:[%s1 + $0x1f0] sm:$0xff]
      %v246 = vld [vmem:[%s1 + $0x1f8] sm:$0xff]
      %v247 = vld [vmem:[%s1 + $0x200] sm:$0xff]
      %v248 = vld [vmem:[%s1 + $0x208] sm:$0xff]
      %v249 = vld [vmem:[%s1 + $0x210] sm:$0xff]
      %v250 = vld [vmem:[%s1 + $0x218] sm:$0xff]
      %v251 = vld [vmem:[%s1 + $0x220] sm:$0xff]
      %v252 = vld [vmem:[%s1 + $0x228] sm:$0xff]
      %v253 = vld [vmem:[%s1 + $0x230] sm:$0xff]
      %v254 = vld [vmem:[%s1 + $0x238] sm:$0xff]
      %v255 = vld [vmem:[%s2] sm:$0xf]
      %v257 = vlaneseq
      %v258 = vshrl.u32 %v257, 7
      %v259 = vsub.s32 0, %v258
      %v260 = vrot.slane %v255, %v259
      %v261 = vlaneseq
      %v262 = vshrl.u32 %v261, 7
      %v263 = vsub.s32 1, %v262
      %v264 = vrot.slane %v255, %v263
      %v265 = vlaneseq
      %v266 = vshrl.u32 %v265, 7
      %v267 = vsub.s32 2, %v266
      %v268 = vrot.slane %v255, %v267
      %v269 = vlaneseq
      %v270 = vshrl.u32 %v269, 7
      %v271 = vsub.s32 3, %v270
      %v272 = vrot.slane %v255, %v271
      %vm277 = vcmask 130048
      %v279 = vsel %vm277, %v180, 0
      %v282 = vsel %vm277, %v182, 0
      %284 = vmatprep.subr.mxu0 %v244
      %285 = vmatpush1.msra.mxu0 %v243
      %286 = vmatprep.subr.mxu0 %v240
      %287 = vmatpush1.msra.mxu0 %v239
      %288 = vmatprep.subr.mxu0 %v236
      %289 = vmatpush1.msra.mxu0 %v235
      %290 = vmatprep.subr.mxu0 %v232
      %291 = vmatpush1.msra.mxu0 %v231
      %292 = vmatprep.subr.mxu0 %v228
      %293 = vmatpush1.msra.mxu0 %v227
      %294 = vmatprep.subr.mxu0 %v224
      %295 = vmatpush1.msra.mxu0 %v223
      %296 = vmatprep.subr.mxu0 %v220
      %297 = vmatpush1.msra.mxu0 %v219
      %298 = vmatprep.subr.mxu0 %v216
      %299 = vmatpush1.msra.mxu0 %v215
      %300 = vmatprep.subr.mxu0 %v212
      %301 = vmatpush1.msra.mxu0 %v211
      %302 = vmatprep.subr.mxu0 %v208
      %303 = vmatpush1.msra.mxu0 %v207
      %304 = vmatprep.subr.mxu0 %v204
      %305 = vmatpush1.msra.mxu0 %v203
      %306 = vmatprep.subr.mxu0 %v200
      %307 = vmatpush1.msra.mxu0 %v199
      %308 = vmatprep.subr.mxu0 %v196
      %309 = vmatpush1.msra.mxu0 %v195
      %310 = vmatprep.subr.mxu0 %v192
      %311 = vmatpush1.msra.mxu0 %v191
      %312 = vmatprep.subr.mxu0 %v188
      %313 = vmatpush1.msra.mxu0 %v187
      %314 = vmatprep.subr.mxu0 %v184
      %315 = vmatpush1.msra.mxu0 %v183
      %316 = vmatprep.subr.mxu0 0.0
      %317 = vmatpush2.msra.mxu0 0.0
      %318 = vmatprep.subr.mxu0 0.0
      %319 = vmatpush2.msra.mxu0 0.0
      %320 = vmatprep.subr.mxu0 0.0
      %321 = vmatpush2.msra.mxu0 0.0
      %322 = vmatprep.subr.mxu0 0.0
      %323 = vmatpush2.msra.mxu0 0.0
      %324 = vmatprep.subr.mxu0 0.0
      %325 = vmatpush2.msra.mxu0 0.0
      %326 = vmatprep.subr.mxu0 0.0
      %327 = vmatpush2.msra.mxu0 0.0
      %328 = vmatprep.subr.mxu0 0.0
      %329 = vmatpush2.msra.mxu0 0.0
      %330 = vmatprep.subr.mxu0 0.0
      %331 = vmatpush2.msra.mxu0 0.0
      %332 = vmatprep.subr.mxu0 0.0
      %333 = vmatpush2.msra.mxu0 0.0
      %334 = vmatprep.subr.mxu0 0.0
      %335 = vmatpush2.msra.mxu0 0.0
      %336 = vmatprep.subr.mxu0 0.0
      %337 = vmatpush2.msra.mxu0 0.0
      %338 = vmatprep.subr.mxu0 0.0
      %339 = vmatpush2.msra.mxu0 0.0
      %340 = vmatprep.subr.mxu0 0.0
      %341 = vmatpush2.msra.mxu0 0.0
      %342 = vmatprep.subr.mxu0 0.0
      %343 = vmatpush2.msra.mxu0 0.0
      %344 = vmatprep.subr.mxu0 %v252
      %345 = vmatpush2.msra.mxu0 %v251
      %346 = vmatprep.subr.mxu0 %v248
      %347 = vmatpush2.msra.mxu0 %v247
      %348 = vmatprep.mubr.f32.mxu0 %v279
      %349 = vmatmul.mubr.f32.gmra.mxu0 %v179
      %v350 = vpop.f32.mrf.mxu0
      %v351 = vadd.f32 %v260, %v350
      %v352 = vpop.f32.mrf.mxu0
      %v353 = vadd.f32 %v264, %v352
      %354 = vmatprep.mubr.f32.mxu0 %v282
      %355 = vmatmul.mubr.f32.gmra.mxu0 %v181
      %v356 = vpop.f32.mrf.mxu0
      %v357 = vadd.f32 %v260, %v356
      %v358 = vpop.f32.mrf.mxu0
      %v359 = vadd.f32 %v264, %v358
      %360 = vdwg.mxu0
      %361 = vmatprep.subr.mxu0 %v246
      %362 = vmatpush1.msra.mxu0 %v245
      %363 = vmatprep.subr.mxu0 %v242
      %364 = vmatpush1.msra.mxu0 %v241
      %365 = vmatprep.subr.mxu0 %v238
      %366 = vmatpush1.msra.mxu0 %v237
      %367 = vmatprep.subr.mxu0 %v234
      %368 = vmatpush1.msra.mxu0 %v233
      %369 = vmatprep.subr.mxu0 %v230
      %370 = vmatpush1.msra.mxu0 %v229
      %371 = vmatprep.subr.mxu0 %v226
      %372 = vmatpush1.msra.mxu0 %v225
      %373 = vmatprep.subr.mxu0 %v222
      %374 = vmatpush1.msra.mxu0 %v221
      %375 = vmatprep.subr.mxu0 %v218
      %376 = vmatpush1.msra.mxu0 %v217
      %377 = vmatprep.subr.mxu0 %v214
      %378 = vmatpush1.msra.mxu0 %v213
      %379 = vmatprep.subr.mxu0 %v210
      %380 = vmatpush1.msra.mxu0 %v209
      %381 = vmatprep.subr.mxu0 %v206
      %382 = vmatpush1.msra.mxu0 %v205
      %383 = vmatprep.subr.mxu0 %v202
      %384 = vmatpush1.msra.mxu0 %v201
      %385 = vmatprep.subr.mxu0 %v198
      %386 = vmatpush1.msra.mxu0 %v197
      %387 = vmatprep.subr.mxu0 %v194
      %388 = vmatpush1.msra.mxu0 %v193
      %389 = vmatprep.subr.mxu0 %v190
      %390 = vmatpush1.msra.mxu0 %v189
      %391 = vmatprep.subr.mxu0 %v186
      %392 = vmatpush1.msra.mxu0 %v185
      %393 = vmatprep.subr.mxu0 0.0
      %394 = vmatpush2.msra.mxu0 0.0
      %395 = vmatprep.subr.mxu0 0.0
      %396 = vmatpush2.msra.mxu0 0.0
      %397 = vmatprep.subr.mxu0 0.0
      %398 = vmatpush2.msra.mxu0 0.0
      %399 = vmatprep.subr.mxu0 0.0
      %400 = vmatpush2.msra.mxu0 0.0
      %401 = vmatprep.subr.mxu0 0.0
      %402 = vmatpush2.msra.mxu0 0.0
      %403 = vmatprep.subr.mxu0 0.0
      %404 = vmatpush2.msra.mxu0 0.0
      %405 = vmatprep.subr.mxu0 0.0
      %406 = vmatpush2.msra.mxu0 0.0
      %407 = vmatprep.subr.mxu0 0.0
      %408 = vmatpush2.msra.mxu0 0.0
      %409 = vmatprep.subr.mxu0 0.0
      %410 = vmatpush2.msra.mxu0 0.0
      %411 = vmatprep.subr.mxu0 0.0
      %412 = vmatpush2.msra.mxu0 0.0
      %413 = vmatprep.subr.mxu0 0.0
      %414 = vmatpush2.msra.mxu0 0.0
      %415 = vmatprep.subr.mxu0 0.0
      %416 = vmatpush2.msra.mxu0 0.0
      %417 = vmatprep.subr.mxu0 0.0
      %418 = vmatpush2.msra.mxu0 0.0
      %419 = vmatprep.subr.mxu0 0.0
      %420 = vmatpush2.msra.mxu0 0.0
      %421 = vmatprep.subr.mxu0 %v254
      %422 = vmatpush2.msra.mxu0 %v253
      %423 = vmatprep.subr.mxu0 %v250
      %424 = vmatpush2.msra.mxu0 %v249
      %425 = vmatprep.mubr.f32.mxu0 %v279
      %426 = vmatmul.mubr.f32.gmra.mxu0 %v179
      %v427 = vpop.f32.mrf.mxu0
      %v428 = vadd.f32 %v268, %v427
      %v429 = vpop.f32.mrf.mxu0
      %v430 = vadd.f32 %v272, %v429
      %431 = vmatprep.mubr.f32.mxu0 %v282
      %432 = vmatmul.mubr.f32.gmra.mxu0 %v181
      %v433 = vpop.f32.mrf.mxu0
      %v434 = vadd.f32 %v268, %v433
      %v435 = vpop.f32.mrf.mxu0
      %v436 = vadd.f32 %v272, %v435
      %437 = vdwg.mxu0
      %v438 = vmax.f32 %v351, 0.0
      %v439 = vmax.f32 %v353, 0.0
      %v440 = vmax.f32 %v428, 0.0
      %v441 = vmax.f32 %v430, 0.0
      %v442 = vmax.f32 %v357, 0.0
      %v443 = vmax.f32 %v359, 0.0
      %v444 = vmax.f32 %v434, 0.0
      %v445 = vmax.f32 %v436, 0.0
      %446 = vst [vmem:[%s177] sm:$0xff] %v438
      %447 = vst [vmem:[%s177 + $0x8] sm:$0xff] %v439
      %448 = vst [vmem:[%s177 + $0x10] sm:$0xff] %v440
      %449 = vst [vmem:[%s177 + $0x18] sm:$0xff] %v441
      %450 = vst [vmem:[%s177 + $0x20] sm:$0xff] %v442
      %451 = vst [vmem:[%s177 + $0x28] sm:$0xff] %v443
      %452 = vst [vmem:[%s177 + $0x30] sm:$0xff] %v444
      %453 = vst [vmem:[%s177 + $0x38] sm:$0xff] %v445
      %s454 = smul.u32 2, %s14
      %p455 = scmp.lt.s32.totalorder %s454, 3
      %s456 = scalar_select %p455, %s454, 3
      %s457 = smul.addr %s456, 4
      %s458 = smul.addr %s457, 8
      %s459 = scalar_lea.vmem %s3, %s458
      // Predicated region
      $region33: #{apply.1} parent=31 // pred_check
        %p460 = pneg %p100
      $region34: #{apply.1} parent=31 // pred_check_branch
        %462 = sbr.rel (%p460) target = $region36
      $region35: #{apply.1} parent=31 // pred_region
        %s463 = smul.u32 2, %s14
      $region36: #{apply.1} parent=31 // pred_fallthru
        _
    $region32: #{apply.1} parent=5 // pred_fallthru
      _
    %p464 = scmp.le.s32.totalorder 2, %s9
    // Predicated region
    $region37: #{apply.1} parent=5 // pred_check
      %p465 = pneg %p464
    $region38: #{apply.1} parent=5 // pred_check_branch
      %467 = sbr.rel (%p465) target = $region40
    $region39: #{apply.1} parent=5 // pred_region
      %s468 = ssub.s32 %s9, 2
      // Predicated region
      $region41: #{apply.1} parent=39 // pred_check
        %p469 = pneg %p106
      $region42: #{apply.1} parent=39 // pred_check_branch
        %471 = sbr.rel (%p469) target = $region44
      $region43: #{apply.1} parent=39 // pred_region
        %s472 = smul.u32 2, %s15
        %p473 = scmp.lt.s32.totalorder %s472, 3
        %s474 = scalar_select %p473, %s472, 3
        %s475 = smul.addr %s474, 4
        %s476 = smul.addr %s475, 8
        %s477 = scalar_lea.vmem %s3, %s476
      $region44: #{apply.1} parent=39 // pred_fallthru
        _
    $region40: #{apply.1} parent=5 // pred_fallthru
      _
  $region6: #{apply.1} parent=0 // loop_footer
    %s13 = sadd.s32 1, %s9
  $region7: #{apply.1} parent=0 // loop_footer_branch
    %8 = sbr.rel target = $region3
  $region8: #{apply.1} parent=0 // loop_exit
    _

</llo_original>
